<compile_context>
chip_gen: v7x
topology: tpu7x:2x2x1
jax: 0.10.0
libtpu: 0.0.40
codegen_flags: <defaults>
</compile_context>

<pallas_src>
import jax
import jax.numpy as jnp
from jax import lax
from jax.experimental import pallas as pl
from jax.experimental.pallas import tpu as pltpu

INPUT_DIM = 10
WIDTH = 20
OUT_DIM = 1

MAX_TILE_B = 4096  # lane-axis batch tile (multiple of 128); see VMEM note above

# Contract dim 1 of LHS with dim 1 of RHS (i.e. A @ B.T) — standard TPU Pallas form.
_TRANS_B_DIMS = (((1,), (1,)), ((), ()))


def _sigmoid(z):
    # sigmoid(z) == 0.5 * tanh(0.5 * z) + 0.5  (exact identity, single EUP push)
    return 0.5 * jnp.tanh(0.5 * z) + 0.5


def mlp_sigmoided_kernel(x_ref, w1_ref, b1_ref, w2_ref, b2_ref, w3_ref, b3_ref, o_ref):
    # x_ref: (TILE_B, INPUT_DIM) in native layout.
    # w*_ref: (out_features, in_features), b*_ref: (out_features, 1).
    # o_ref: (OUT_DIM, TILE_B) — batch on the lane axis => lane-dense store.
    x = x_ref[...]

    # Layer 1: contract over INPUT_DIM (trans-B matmul) -> (WIDTH, TILE_B), batch on lanes.
    h = lax.dot_general(w1_ref[...], x, _TRANS_B_DIMS,
                        preferred_element_type=jnp.float32) + b1_ref[...]
    h = _sigmoid(h)

    # Layer 2: (WIDTH, WIDTH) @ (WIDTH, TILE_B) -> (WIDTH, TILE_B)
    h = jnp.dot(w2_ref[...], h, preferred_element_type=jnp.float32) + b2_ref[...]
    h = _sigmoid(h)

    # Output layer: (OUT_DIM, WIDTH) @ (WIDTH, TILE_B) -> (OUT_DIM, TILE_B)
    y = jnp.dot(w3_ref[...], h, preferred_element_type=jnp.float32) + b3_ref[...]
    o_ref[...] = _sigmoid(y).astype(o_ref.dtype)


def mlp_sigmoided(x, params):
    """x: (B, INPUT_DIM) float32 -> (B, OUT_DIM) float32."""
    w1, b1, w2, b2, w3, b3 = params
    B = x.shape[0]

    # Batch tile: as large as possible (amortize per-step overhead) but keep >= 2
    # grid steps when B allows, so both v7x TensorCores get work.
    half = pl.cdiv(pl.cdiv(B, 2), 128) * 128
    tile_b = max(128, min(MAX_TILE_B, half))
    Bp = pl.cdiv(B, tile_b) * tile_b

    # No transpose on the host; only zero-pad batch rows when needed.
    x_p = x if Bp == B else jnp.pad(x, ((0, Bp - B), (0, 0)))

    grid = (Bp // tile_b,)
    const = lambda shape: pl.BlockSpec(shape, lambda i: (0, 0))  # VMEM-resident params

    out_t = pl.pallas_call(
        mlp_sigmoided_kernel,
        out_shape=jax.ShapeDtypeStruct((OUT_DIM, Bp), jnp.float32),
        grid=grid,
        in_specs=[
            pl.BlockSpec((tile_b, INPUT_DIM), lambda i: (i, 0)),  # x tile, native layout
            const((WIDTH, INPUT_DIM)),   # w1
            const((WIDTH, 1)),           # b1
            const((WIDTH, WIDTH)),       # w2
            const((WIDTH, 1)),           # b2
            const((OUT_DIM, WIDTH)),     # w3
            const((OUT_DIM, 1)),         # b3
        ],
        out_specs=pl.BlockSpec((OUT_DIM, tile_b), lambda i: (0, i)),
        compiler_params=pltpu.CompilerParams(
            dimension_semantics=("parallel",)),
    )(x_p, w1, b1, w2, b2, w3, b3)

    # (1, Bp) lane-dense output -> PyTorch-facing (B, 1); slice drops padded columns.
    return out_t[:, :B].T


def init_params(key):
    """Deterministic init mimicking nn.Linear's uniform(-1/sqrt(fan_in), 1/sqrt(fan_in)).

    Weights stored (out_features, in_features); biases stored (out_features, 1).
    """
    ks = jax.random.split(key, 6)

    def linear(kw, kb, fan_in, fan_out):
        bound = 1.0 / jnp.sqrt(fan_in)
        w = jax.random.uniform(kw, (fan_out, fan_in), jnp.float32, -bound, bound)
        b = jax.random.uniform(kb, (fan_out, 1), jnp.float32, -bound, bound)
        return w, b

    w1, b1 = linear(ks[0], ks[1], INPUT_DIM, WIDTH)
    w2, b2 = linear(ks[2], ks[3], WIDTH, WIDTH)
    w3, b3 = linear(ks[4], ks[5], WIDTH, OUT_DIM)
    return (w1, b1, w2, b2, w3, b3)


def reference(x, params):
    w1, b1, w2, b2, w3, b3 = params
    h = jax.nn.sigmoid(x @ w1.T + b1.T)
    h = jax.nn.sigmoid(h @ w2.T + b2.T)
    return jax.nn.sigmoid(h @ w3.T + b3.T)


if __name__ == "__main__":
    key = jax.random.PRNGKey(0)
    kx, kp = jax.random.split(key)

    B = 8
    x = jax.random.normal(kx, (B, INPUT_DIM), jnp.float32)
    params = init_params(kp)

    out = mlp_sigmoided(x, params)
    out = jax.block_until_ready(out)

    ref = reference(x, params)
    assert out.shape == (B, OUT_DIM)
    assert jnp.allclose(out, ref, atol=1e-5, rtol=1e-5), "mismatch vs reference"

    print("KERNEL_OK")
</pallas_src>

<mosaic_0001>
module attributes {stable_mosaic.version = 11 : i64} {
  func.func @mlp_sigmoided_kernel(%arg0: i32, %arg1: memref<128x10xf32, #tpu.memory_space<vmem>>, %arg2: memref<20x10xf32, #tpu.memory_space<vmem>>, %arg3: memref<20x1xf32, #tpu.memory_space<vmem>>, %arg4: memref<20x20xf32, #tpu.memory_space<vmem>>, %arg5: memref<20x1xf32, #tpu.memory_space<vmem>>, %arg6: memref<1x20xf32, #tpu.memory_space<vmem>>, %arg7: memref<1x1xf32, #tpu.memory_space<vmem>>, %arg8: memref<1x128xf32, #tpu.memory_space<vmem>>) attributes {dimension_semantics = [#tpu.dimension_semantics<parallel>], iteration_bounds = array<i64: 1>, scalar_prefetch = 0 : i64, scratch_operands = 0 : i64, tpu.core_type = #tpu.core_type<tc>, window_params = [{transform_indices = @transform_0, window_bounds = array<i64: 128, 10>}, {pipeline_mode = #tpu.pipeline_mode<synchronous>, transform_indices = @transform_1, window_bounds = array<i64: 20, 10>}, {pipeline_mode = #tpu.pipeline_mode<synchronous>, transform_indices = @transform_2, window_bounds = array<i64: 20, 1>}, {pipeline_mode = #tpu.pipeline_mode<synchronous>, transform_indices = @transform_3, window_bounds = array<i64: 20, 20>}, {pipeline_mode = #tpu.pipeline_mode<synchronous>, transform_indices = @transform_4, window_bounds = array<i64: 20, 1>}, {pipeline_mode = #tpu.pipeline_mode<synchronous>, transform_indices = @transform_5, window_bounds = array<i64: 1, 20>}, {pipeline_mode = #tpu.pipeline_mode<synchronous>, transform_indices = @transform_6, window_bounds = array<i64: 1, 1>}, {transform_indices = @transform_7, window_bounds = array<i64: 1, 128>}]} {
    %c0 = arith.constant 0 : index
    %c0_0 = arith.constant 0 : index
    %0 = vector.load %arg1[%c0, %c0_0] : memref<128x10xf32, #tpu.memory_space<vmem>>, vector<128x10xf32>
    %c0_1 = arith.constant 0 : index
    %c0_2 = arith.constant 0 : index
    %1 = vector.load %arg2[%c0_1, %c0_2] : memref<20x10xf32, #tpu.memory_space<vmem>>, vector<20x10xf32>
    %cst = arith.constant dense<0.000000e+00> : vector<20x128xf32>
    %2 = tpu.matmul %1, %0, %cst {dimension_numbers = #tpu.dot_dimension_numbers<[1], [1], [0], [0], [0, 0, 1, 0], [], []>} : vector<20x10xf32>, vector<128x10xf32>, vector<20x128xf32> -> vector<20x128xf32>
    %c0_3 = arith.constant 0 : index
    %c0_4 = arith.constant 0 : index
    %3 = vector.load %arg3[%c0_3, %c0_4] : memref<20x1xf32, #tpu.memory_space<vmem>>, vector<20x1xf32>
    %4 = vector.broadcast %3 : vector<20x1xf32> to vector<20x128xf32>
    %5 = arith.addf %2, %4 : vector<20x128xf32>
    %cst_5 = arith.constant 5.000000e-01 : f32
    %6 = vector.broadcast %cst_5 : f32 to vector<20x128xf32>
    %7 = arith.mulf %6, %5 : vector<20x128xf32>
    %8 = math.tanh %7 : vector<20x128xf32>
    %cst_6 = arith.constant 5.000000e-01 : f32
    %9 = vector.broadcast %cst_6 : f32 to vector<20x128xf32>
    %10 = arith.mulf %9, %8 : vector<20x128xf32>
    %cst_7 = arith.constant 5.000000e-01 : f32
    %11 = vector.broadcast %cst_7 : f32 to vector<20x128xf32>
    %12 = arith.addf %10, %11 : vector<20x128xf32>
    %c0_8 = arith.constant 0 : index
    %c0_9 = arith.constant 0 : index
    %13 = vector.load %arg4[%c0_8, %c0_9] : memref<20x20xf32, #tpu.memory_space<vmem>>, vector<20x20xf32>
    %cst_10 = arith.constant dense<0.000000e+00> : vector<20x128xf32>
    %14 = tpu.matmul %13, %12, %cst_10 {dimension_numbers = #tpu.dot_dimension_numbers<[1], [0], [0], [1], [0, 0, 1, 1], [], []>} : vector<20x20xf32>, vector<20x128xf32>, vector<20x128xf32> -> vector<20x128xf32>
    %c0_11 = arith.constant 0 : index
    %c0_12 = arith.constant 0 : index
    %15 = vector.load %arg5[%c0_11, %c0_12] : memref<20x1xf32, #tpu.memory_space<vmem>>, vector<20x1xf32>
    %16 = vector.broadcast %15 : vector<20x1xf32> to vector<20x128xf32>
    %17 = arith.addf %14, %16 : vector<20x128xf32>
    %cst_13 = arith.constant 5.000000e-01 : f32
    %18 = vector.broadcast %cst_13 : f32 to vector<20x128xf32>
    %19 = arith.mulf %18, %17 : vector<20x128xf32>
    %20 = math.tanh %19 : vector<20x128xf32>
    %cst_14 = arith.constant 5.000000e-01 : f32
    %21 = vector.broadcast %cst_14 : f32 to vector<20x128xf32>
    %22 = arith.mulf %21, %20 : vector<20x128xf32>
    %cst_15 = arith.constant 5.000000e-01 : f32
    %23 = vector.broadcast %cst_15 : f32 to vector<20x128xf32>
    %24 = arith.addf %22, %23 : vector<20x128xf32>
    %c0_16 = arith.constant 0 : index
    %c0_17 = arith.constant 0 : index
    %25 = vector.load %arg6[%c0_16, %c0_17] : memref<1x20xf32, #tpu.memory_space<vmem>>, vector<1x20xf32>
    %cst_18 = arith.constant dense<0.000000e+00> : vector<1x128xf32>
    %26 = tpu.matmul %25, %24, %cst_18 {dimension_numbers = #tpu.dot_dimension_numbers<[1], [0], [0], [1], [0, 0, 1, 1], [], []>} : vector<1x20xf32>, vector<20x128xf32>, vector<1x128xf32> -> vector<1x128xf32>
    %c0_19 = arith.constant 0 : index
    %c0_20 = arith.constant 0 : index
    %27 = vector.load %arg7[%c0_19, %c0_20] : memref<1x1xf32, #tpu.memory_space<vmem>>, vector<1x1xf32>
    %28 = vector.broadcast %27 : vector<1x1xf32> to vector<1x128xf32>
    %29 = arith.addf %26, %28 : vector<1x128xf32>
    %cst_21 = arith.constant 5.000000e-01 : f32
    %30 = vector.broadcast %cst_21 : f32 to vector<1x128xf32>
    %31 = arith.mulf %30, %29 : vector<1x128xf32>
    %32 = math.tanh %31 : vector<1x128xf32>
    %cst_22 = arith.constant 5.000000e-01 : f32
    %33 = vector.broadcast %cst_22 : f32 to vector<1x128xf32>
    %34 = arith.mulf %33, %32 : vector<1x128xf32>
    %cst_23 = arith.constant 5.000000e-01 : f32
    %35 = vector.broadcast %cst_23 : f32 to vector<1x128xf32>
    %36 = arith.addf %34, %35 : vector<1x128xf32>
    %c0_24 = arith.constant 0 : index
    %c0_25 = arith.constant 0 : index
    %37 = vector.load %arg8[%c0_24, %c0_25] : memref<1x128xf32, #tpu.memory_space<vmem>>, vector<1x128xf32>
    tpu.vector_store %arg8[%c0_24, %c0_25], %36 {strides = array<i32>} : memref<1x128xf32, #tpu.memory_space<vmem>>, vector<1x128xf32>,
    return
  }
  func.func @transform_0(%arg0: i32) -> (i32, i32) {
    %c0_i32 = arith.constant 0 : i32
    %c0_i32_0 = arith.constant 0 : i32
    return %arg0, %c0_i32 : i32, i32
  }
  func.func @transform_1(%arg0: i32) -> (i32, i32) {
    %c0_i32 = arith.constant 0 : i32
    %c0_i32_0 = arith.constant 0 : i32
    %c0_i32_1 = arith.constant 0 : i32
    return %c0_i32, %c0_i32_0 : i32, i32
  }
  func.func @transform_2(%arg0: i32) -> (i32, i32) {
    %c0_i32 = arith.constant 0 : i32
    %c0_i32_0 = arith.constant 0 : i32
    %c0_i32_1 = arith.constant 0 : i32
    return %c0_i32, %c0_i32_0 : i32, i32
  }
  func.func @transform_3(%arg0: i32) -> (i32, i32) {
    %c0_i32 = arith.constant 0 : i32
    %c0_i32_0 = arith.constant 0 : i32
    %c0_i32_1 = arith.constant 0 : i32
    return %c0_i32, %c0_i32_0 : i32, i32
  }
  func.func @transform_4(%arg0: i32) -> (i32, i32) {
    %c0_i32 = arith.constant 0 : i32
    %c0_i32_0 = arith.constant 0 : i32
    %c0_i32_1 = arith.constant 0 : i32
    return %c0_i32, %c0_i32_0 : i32, i32
  }
  func.func @transform_5(%arg0: i32) -> (i32, i32) {
    %c0_i32 = arith.constant 0 : i32
    %c0_i32_0 = arith.constant 0 : i32
    %c0_i32_1 = arith.constant 0 : i32
    return %c0_i32, %c0_i32_0 : i32, i32
  }
  func.func @transform_6(%arg0: i32) -> (i32, i32) {
    %c0_i32 = arith.constant 0 : i32
    %c0_i32_0 = arith.constant 0 : i32
    %c0_i32_1 = arith.constant 0 : i32
    return %c0_i32, %c0_i32_0 : i32, i32
  }
  func.func @transform_7(%arg0: i32) -> (i32, i32) {
    %c0_i32 = arith.constant 0 : i32
    %c0_i32_0 = arith.constant 0 : i32
    return %c0_i32, %arg0 : i32, i32
  }
}

</mosaic_0001>

<llo_original>
// kernel: tpu_custom_call.1
$region0: #{tpu_custom_call.1}
  #allocation0 [shape = 'u32[]', space=smem, size = 0x4, offset = 0x4, fixed_abs, tag = 'smem constant byte address 0x4 - core index']
  #allocation1 [shape = 'u32[144,128]{1,0:T(1,128)}', space=vmem, size = 0x12000, scoped, tag = 'internal scratch']
  #allocation2 [shape = 'f32[1,1]{1,0:T(1,128)S(1)}', space=vmem, size = 0x200, scoped, tag = 'scoped memory for tpu_custom_call.1']
  %s0 = inlined_call_operand.vmem [shape: f32[128,10], index: 0, kind: input, shape index: {}]
  %s1 = inlined_call_operand.vmem [shape: f32[20,10], index: 1, kind: input, shape index: {}]
  %s2 = inlined_call_operand.vmem [shape: f32[20,1], index: 2, kind: input, shape index: {}]
  %s3 = inlined_call_operand.vmem [shape: f32[20,20], index: 3, kind: input, shape index: {}]
  %s4 = inlined_call_operand.vmem [shape: f32[20,1], index: 4, kind: input, shape index: {}]
  %s5 = inlined_call_operand.vmem [shape: f32[1,20], index: 5, kind: input, shape index: {}]
  %s6 = inlined_call_operand.<no memory space> [shape: f32[1,1], index: 6, kind: input, shape index: {}]
  %s7 = inlined_call_operand.hbm [shape: f32[1,128], index: 7, kind: output, shape index: {}]
  %s8 = sld [smem:[#allocation0]]
  $region38: #{tpu_custom_call.1} parent=0
    _
  %s10 = ssub.s32 1, %s8
  %s11 = scalar_select 0, %s10, %s8
  %v12 = vstv %s6
  %13 = vst [vmem:[#allocation2] sm:$0x1] %v12
  $region1: #{tpu_custom_call.1} parent=0
    #allocation3 [shape = 'u8[512]{0}', space=vmem, size = 0x400, scoped, tag = 'output window, operand 0, single buffered']
    #allocation4 [shape = 's32[1]{0}', space=sflag, size = 0x4, scoped, tag = 'scoped memory for tpu_custom_call.1']
    %14 = vsyncpa [#allocation4], 0
    // Predicated region
    $region2: #{tpu_custom_call.1} parent=1 // pred_check
      _
    $region3: #{tpu_custom_call.1} parent=1 // pred_check_branch
      %16 = sbr.rel (0) target = $region5
    $region4: #{tpu_custom_call.1} parent=1 // pred_region
      _
    $region5: #{tpu_custom_call.1} parent=1 // pred_fallthru
      _
    // Predicated region
    $region6: #{tpu_custom_call.1} parent=1 // pred_check
      _
    $region7: #{tpu_custom_call.1} parent=1 // pred_check_branch
      %18 = sbr.rel (0) target = $region9
    $region8: #{tpu_custom_call.1} parent=1 // pred_region
      _
    $region9: #{tpu_custom_call.1} parent=1 // pred_fallthru
      _
    // Predicated region
    $region10: #{tpu_custom_call.1} parent=1 // pred_check
      _
    $region11: #{tpu_custom_call.1} parent=1 // pred_check_branch
      %20 = sbr.rel (0) target = $region13
    $region12: #{tpu_custom_call.1} parent=1 // pred_region
      _
    $region13: #{tpu_custom_call.1} parent=1 // pred_fallthru
      _
    // Predicated region
    $region14: #{tpu_custom_call.1} parent=1 // pred_check
      _
    $region15: #{tpu_custom_call.1} parent=1 // pred_check_branch
      %22 = sbr.rel (0) target = $region17
    $region16: #{tpu_custom_call.1} parent=1 // pred_region
      _
    $region17: #{tpu_custom_call.1} parent=1 // pred_fallthru
      _
    // Predicated region
    $region18: #{tpu_custom_call.1} parent=1 // pred_check
      _
    $region19: #{tpu_custom_call.1} parent=1 // pred_check_branch
      %24 = sbr.rel (0) target = $region21
    $region20: #{tpu_custom_call.1} parent=1 // pred_region
      _
    $region21: #{tpu_custom_call.1} parent=1 // pred_fallthru
      _
    // Predicated region
    $region22: #{tpu_custom_call.1} parent=1 // pred_check
      _
    $region23: #{tpu_custom_call.1} parent=1 // pred_check_branch
      %26 = sbr.rel (0) target = $region25
    $region24: #{tpu_custom_call.1} parent=1 // pred_region
      _
    $region25: #{tpu_custom_call.1} parent=1 // pred_fallthru
      _
    // Predicated region
    $region26: #{tpu_custom_call.1} parent=1 // pred_check
      _
    $region27: #{tpu_custom_call.1} parent=1 // pred_check_branch
      %28 = sbr.rel (0) target = $region29
    $region28: #{tpu_custom_call.1} parent=1 // pred_region
      _
    $region29: #{tpu_custom_call.1} parent=1 // pred_fallthru
      _
    %v29 = vld [vmem:[%s0] sm:$0xff]
    %v30 = vld [vmem:[%s0 + $0x8] sm:$0xff]
    %v31 = vld [vmem:[%s0 + $0x10] sm:$0xff]
    %v32 = vld [vmem:[%s0 + $0x18] sm:$0xff]
    %v33 = vld [vmem:[%s0 + $0x20] sm:$0xff]
    %v34 = vld [vmem:[%s0 + $0x28] sm:$0xff]
    %v35 = vld [vmem:[%s0 + $0x30] sm:$0xff]
    %v36 = vld [vmem:[%s0 + $0x38] sm:$0xff]
    %v37 = vld [vmem:[%s0 + $0x40] sm:$0xff]
    %v38 = vld [vmem:[%s0 + $0x48] sm:$0xff]
    %v39 = vld [vmem:[%s0 + $0x50] sm:$0xff]
    %v40 = vld [vmem:[%s0 + $0x58] sm:$0xff]
    %v41 = vld [vmem:[%s0 + $0x60] sm:$0xff]
    %v42 = vld [vmem:[%s0 + $0x68] sm:$0xff]
    %v43 = vld [vmem:[%s0 + $0x70] sm:$0xff]
    %v44 = vld [vmem:[%s0 + $0x78] sm:$0xff]
    %v45 = vld [vmem:[%s1] sm:$0xff]
    %v46 = vld [vmem:[%s1 + $0x8] sm:$0xff]
    %v47 = vld [vmem:[%s1 + $0x10] sm:$0xf]
    %v48 = vld [vmem:[%s2] sm:$0xff]
    %v49 = vld [vmem:[%s2 + $0x8] sm:$0xff]
    %v50 = vld [vmem:[%s2 + $0x10] sm:$0xf]
    %52 = vset.pattern.permute.xlu0 0
    %53 = vperm.xlu0 %52, %v48
    %v54 = vpop.permute.xlu0 %53
    %57 = vset.pattern.permute.xlu0 0
    %58 = vperm.xlu0 %57, %v49
    %v59 = vpop.permute.xlu0 %58
    %62 = vset.pattern.permute.xlu0 0
    %63 = vperm.xlu0 %62, %v50
    %v64 = vpop.permute.xlu0 %63
    %vm66 = vcmask 80896
    %v68 = vsel %vm66, %v45, 0
    %v71 = vsel %vm66, %v46, 0
    %v74 = vsel %vm66, %v47, 0
    %v77 = vsel %vm66, %v29, 0
    %v80 = vsel %vm66, %v30, 0
    %v83 = vsel %vm66, %v31, 0
    %v86 = vsel %vm66, %v32, 0
    %v89 = vsel %vm66, %v33, 0
    %v92 = vsel %vm66, %v34, 0
    %v95 = vsel %vm66, %v35, 0
    %v98 = vsel %vm66, %v36, 0
    %v101 = vsel %vm66, %v37, 0
    %v104 = vsel %vm66, %v38, 0
    %v107 = vsel %vm66, %v39, 0
    %v110 = vsel %vm66, %v40, 0
    %v113 = vsel %vm66, %v41, 0
    %v116 = vsel %vm66, %v42, 0
    %v119 = vsel %vm66, %v43, 0
    %v122 = vsel %vm66, %v44, 0
    %124 = vmatprep.subr.mxu0 0.0
    %125 = vmatpush1.xpose.msra.mxu0 %v77
    %126 = vmatprep.subr.mxu0 0.0
    %127 = vmatpush1.xpose.msra.mxu0 %v80
    %128 = vmatprep.subr.mxu0 0.0
    %129 = vmatpush1.xpose.msra.mxu0 %v83
    %130 = vmatprep.subr.mxu0 0.0
    %131 = vmatpush1.xpose.msra.mxu0 %v86
    %132 = vmatprep.subr.mxu0 0.0
    %133 = vmatpush1.xpose.msra.mxu0 %v89
    %134 = vmatprep.subr.mxu0 0.0
    %135 = vmatpush1.xpose.msra.mxu0 %v92
    %136 = vmatprep.subr.mxu0 0.0
    %137 = vmatpush1.xpose.msra.mxu0 %v95
    %138 = vmatprep.subr.mxu0 0.0
    %139 = vmatpush1.xpose.msra.mxu0 %v98
    %140 = vmatprep.subr.mxu0 0.0
    %141 = vmatpush1.xpose.msra.mxu0 %v101
    %142 = vmatprep.subr.mxu0 0.0
    %143 = vmatpush1.xpose.msra.mxu0 %v104
    %144 = vmatprep.subr.mxu0 0.0
    %145 = vmatpush1.xpose.msra.mxu0 %v107
    %146 = vmatprep.subr.mxu0 0.0
    %147 = vmatpush1.xpose.msra.mxu0 %v110
    %148 = vmatprep.subr.mxu0 0.0
    %149 = vmatpush1.xpose.msra.mxu0 %v113
    %150 = vmatprep.subr.mxu0 0.0
    %151 = vmatpush1.xpose.msra.mxu0 %v116
    %152 = vmatprep.subr.mxu0 0.0
    %153 = vmatpush1.xpose.msra.mxu0 %v119
    %154 = vmatprep.subr.mxu0 0.0
    %155 = vmatpush1.xpose.msra.mxu0 %v122
    %156 = vmatprep.subr.mxu0 0.0
    %157 = vmatpush1.xpose.msra.mxu0 0.0
    %158 = vmatprep.subr.mxu0 0.0
    %159 = vmatpush1.xpose.msra.mxu0 0.0
    %160 = vmatprep.subr.mxu0 0.0
    %161 = vmatpush1.xpose.msra.mxu0 0.0
    %162 = vmatprep.subr.mxu0 0.0
    %163 = vmatpush1.xpose.msra.mxu0 0.0
    %164 = vmatprep.subr.mxu0 0.0
    %165 = vmatpush1.xpose.msra.mxu0 0.0
    %166 = vmatprep.subr.mxu0 0.0
    %167 = vmatpush1.xpose.msra.mxu0 0.0
    %168 = vmatprep.subr.mxu0 0.0
    %169 = vmatpush1.xpose.msra.mxu0 0.0
    %170 = vmatprep.subr.mxu0 0.0
    %171 = vmatpush1.xpose.msra.mxu0 0.0
    %172 = vmatprep.subr.mxu0 0.0
    %173 = vmatpush1.xpose.msra.mxu0 0.0
    %174 = vmatprep.subr.mxu0 0.0
    %175 = vmatpush1.xpose.msra.mxu0 0.0
    %176 = vmatprep.subr.mxu0 0.0
    %177 = vmatpush1.xpose.msra.mxu0 0.0
    %178 = vmatprep.subr.mxu0 0.0
    %179 = vmatpush1.xpose.msra.mxu0 0.0
    %180 = vmatprep.subr.mxu0 0.0
    %181 = vmatpush1.xpose.msra.mxu0 0.0
    %182 = vmatprep.subr.mxu0 0.0
    %183 = vmatpush1.xpose.msra.mxu0 0.0
    %184 = vmatprep.subr.mxu0 0.0
    %185 = vmatpush1.xpose.msra.mxu0 0.0
    %186 = vmatprep.subr.mxu0 0.0
    %187 = vmatpush1.xpose.msra.mxu0 0.0
    %188 = vmatprep.mubr.f32.mxu0 0.0
    %189 = vmatmul.mubr.f32.gmra.mrb[0].mxu0 %v68
    %v190 = vpop.f32.mrb[0].mxu0
    %v191 = vadd.f32 %v54, %v190
    %v192 = vpop.f32.mrb[0].mxu0
    %193 = vmatprep.mubr.f32.mxu0 0.0
    %194 = vmatmul.mubr.f32.gmra.mrb[0].mxu0 %v71
    %v195 = vpop.f32.mrb[0].mxu0
    %v196 = vadd.f32 %v59, %v195
    %v197 = vpop.f32.mrb[0].mxu0
    %198 = vmatprep.mubr.f32.mxu0 0.0
    %199 = vmatmul.mubr.f32.gmra.mrb[0].mxu0 %v74
    %v200 = vpop.f32.mrb[0].mxu0
    %v201 = vadd.f32 %v64, %v200
    %v202 = vpop.f32.mrb[0].mxu0
    %203 = vdwg.mxu0
    %v204 = vmul.f32 %v191, 0.5
    %v205 = vmul.f32 %v196, 0.5
    %v206 = vmul.f32 %v201, 0.5
    %v207 = vtanh.pop %v204
    %v208 = vtanh.pop %v205
    %v209 = vtanh.pop %v206
    %v210 = vmul.f32 %v207, 0.5
    %v211 = vmul.f32 %v208, 0.5
    %v212 = vmul.f32 %v209, 0.5
    %v213 = vadd.f32 %v210, 0.5
    %v214 = vadd.f32 %v211, 0.5
    %v215 = vadd.f32 %v212, 0.5
    %v216 = vld [vmem:[%s3] sm:$0xff]
    %v217 = vld [vmem:[%s3 + $0x8] sm:$0xff]
    %v218 = vld [vmem:[%s3 + $0x10] sm:$0xf]
    %v219 = vld [vmem:[%s4] sm:$0xff]
    %v220 = vld [vmem:[%s4 + $0x8] sm:$0xff]
    %v221 = vld [vmem:[%s4 + $0x10] sm:$0xf]
    %223 = vset.pattern.permute.xlu0 0
    %224 = vperm.xlu0 %223, %v219
    %v225 = vpop.permute.xlu0 %224
    %228 = vset.pattern.permute.xlu0 0
    %229 = vperm.xlu0 %228, %v220
    %v230 = vpop.permute.xlu0 %229
    %233 = vset.pattern.permute.xlu0 0
    %234 = vperm.xlu0 %233, %v221
    %v235 = vpop.permute.xlu0 %234
    %vm237 = vcmask 162816
    %v239 = vsel %vm237, %v216, 0
    %v242 = vsel %vm237, %v217, 0
    %v245 = vsel %vm237, %v218, 0
    %vm247 = vcmask 1043456
    %v249 = vsel %vm247, %v215, 0
    %251 = vmatprep.subr.mxu0 0.0
    %252 = vmatpush1.msra.mxu0 %v213
    %253 = vmatprep.subr.mxu0 0.0
    %254 = vmatpush1.msra.mxu0 %v214
    %255 = vmatprep.subr.mxu0 0.0
    %256 = vmatpush1.msra.mxu0 %v249
    %257 = vmatprep.subr.mxu0 0.0
    %258 = vmatpush1.msra.mxu0 0.0
    %259 = vmatprep.subr.mxu0 0.0
    %260 = vmatpush1.msra.mxu0 0.0
    %261 = vmatprep.subr.mxu0 0.0
    %262 = vmatpush1.msra.mxu0 0.0
    %263 = vmatprep.subr.mxu0 0.0
    %264 = vmatpush1.msra.mxu0 0.0
    %265 = vmatprep.subr.mxu0 0.0
    %266 = vmatpush1.msra.mxu0 0.0
    %267 = vmatprep.subr.mxu0 0.0
    %268 = vmatpush1.msra.mxu0 0.0
    %269 = vmatprep.subr.mxu0 0.0
    %270 = vmatpush1.msra.mxu0 0.0
    %271 = vmatprep.subr.mxu0 0.0
    %272 = vmatpush1.msra.mxu0 0.0
    %273 = vmatprep.subr.mxu0 0.0
    %274 = vmatpush1.msra.mxu0 0.0
    %275 = vmatprep.subr.mxu0 0.0
    %276 = vmatpush1.msra.mxu0 0.0
    %277 = vmatprep.subr.mxu0 0.0
    %278 = vmatpush1.msra.mxu0 0.0
    %279 = vmatprep.subr.mxu0 0.0
    %280 = vmatpush1.msra.mxu0 0.0
    %281 = vmatprep.subr.mxu0 0.0
    %282 = vmatpush1.msra.mxu0 0.0
    %283 = vmatprep.subr.mxu0 0.0
    %284 = vmatpush1.msra.mxu0 0.0
    %285 = vmatprep.subr.mxu0 0.0
    %286 = vmatpush1.msra.mxu0 0.0
    %287 = vmatprep.subr.mxu0 0.0
    %288 = vmatpush1.msra.mxu0 0.0
    %289 = vmatprep.subr.mxu0 0.0
    %290 = vmatpush1.msra.mxu0 0.0
    %291 = vmatprep.subr.mxu0 0.0
    %292 = vmatpush1.msra.mxu0 0.0
    %293 = vmatprep.subr.mxu0 0.0
    %294 = vmatpush1.msra.mxu0 0.0
    %295 = vmatprep.subr.mxu0 0.0
    %296 = vmatpush1.msra.mxu0 0.0
    %297 = vmatprep.subr.mxu0 0.0
    %298 = vmatpush1.msra.mxu0 0.0
    %299 = vmatprep.subr.mxu0 0.0
    %300 = vmatpush1.msra.mxu0 0.0
    %301 = vmatprep.subr.mxu0 0.0
    %302 = vmatpush1.msra.mxu0 0.0
    %303 = vmatprep.subr.mxu0 0.0
    %304 = vmatpush1.msra.mxu0 0.0
    %305 = vmatprep.subr.mxu0 0.0
    %306 = vmatpush1.msra.mxu0 0.0
    %307 = vmatprep.subr.mxu0 0.0
    %308 = vmatpush1.msra.mxu0 0.0
    %309 = vmatprep.subr.mxu0 0.0
    %310 = vmatpush1.msra.mxu0 0.0
    %311 = vmatprep.subr.mxu0 0.0
    %312 = vmatpush1.msra.mxu0 0.0
    %313 = vmatprep.subr.mxu0 0.0
    %314 = vmatpush1.msra.mxu0 0.0
    %315 = vmatprep.mubr.f32.mxu0 0.0
    %316 = vmatmul.mubr.f32.gmra.mrb[0].mxu0 %v239
    %v317 = vpop.f32.mrb[0].mxu0
    %v318 = vadd.f32 %v225, %v317
    %v319 = vpop.f32.mrb[0].mxu0
    %320 = vmatprep.mubr.f32.mxu0 0.0
    %321 = vmatmul.mubr.f32.gmra.mrb[0].mxu0 %v242
    %v322 = vpop.f32.mrb[0].mxu0
    %v323 = vadd.f32 %v230, %v322
    %v324 = vpop.f32.mrb[0].mxu0
    %325 = vmatprep.mubr.f32.mxu0 0.0
    %326 = vmatmul.mubr.f32.gmra.mrb[0].mxu0 %v245
    %v327 = vpop.f32.mrb[0].mxu0
    %v328 = vadd.f32 %v235, %v327
    %v329 = vpop.f32.mrb[0].mxu0
    %330 = vdwg.mxu0
    %v331 = vmul.f32 %v318, 0.5
    %v332 = vmul.f32 %v323, 0.5
    %v333 = vmul.f32 %v328, 0.5
    %v334 = vtanh.pop %v331
    %v335 = vtanh.pop %v332
    %v336 = vtanh.pop %v333
    %v337 = vmul.f32 %v334, 0.5
    %v338 = vmul.f32 %v335, 0.5
    %v339 = vmul.f32 %v336, 0.5
    %v340 = vadd.f32 %v337, 0.5
    %v341 = vadd.f32 %v338, 0.5
    %v342 = vadd.f32 %v339, 0.5
    %v343 = vld [vmem:[%s5] sm:$0x1]
    %v344 = vld [vmem:[#allocation2] sm:$0x1]
    %346 = vset.pattern.permute.xlu0 0
    %347 = vperm.xlu0 %346, %v344
    %v348 = vpop.permute.xlu0 %347
    %v350 = vlaneseq
    %v351 = vshrl.u32 %v350, 7
    %v352 = vsub.s32 0, %v351
    %v353 = vrot.slane %v348, %v352
    %v355 = vsel %vm237, %v343, 0
    %v358 = vsel %vm247, %v342, 0
    %360 = vmatprep.subr.mxu0 0.0
    %361 = vmatpush1.msra.mxu0 %v340
    %362 = vmatprep.subr.mxu0 0.0
    %363 = vmatpush1.msra.mxu0 %v341
    %364 = vmatprep.subr.mxu0 0.0
    %365 = vmatpush1.msra.mxu0 %v358
    %366 = vmatprep.subr.mxu0 0.0
    %367 = vmatpush1.msra.mxu0 0.0
    %368 = vmatprep.subr.mxu0 0.0
    %369 = vmatpush1.msra.mxu0 0.0
    %370 = vmatprep.subr.mxu0 0.0
    %371 = vmatpush1.msra.mxu0 0.0
    %372 = vmatprep.subr.mxu0 0.0
    %373 = vmatpush1.msra.mxu0 0.0
    %374 = vmatprep.subr.mxu0 0.0
    %375 = vmatpush1.msra.mxu0 0.0
    %376 = vmatprep.subr.mxu0 0.0
    %377 = vmatpush1.msra.mxu0 0.0
    %378 = vmatprep.subr.mxu0 0.0
    %379 = vmatpush1.msra.mxu0 0.0
    %380 = vmatprep.subr.mxu0 0.0
    %381 = vmatpush1.msra.mxu0 0.0
    %382 = vmatprep.subr.mxu0 0.0
    %383 = vmatpush1.msra.mxu0 0.0
    %384 = vmatprep.subr.mxu0 0.0
    %385 = vmatpush1.msra.mxu0 0.0
    %386 = vmatprep.subr.mxu0 0.0
    %387 = vmatpush1.msra.mxu0 0.0
    %388 = vmatprep.subr.mxu0 0.0
    %389 = vmatpush1.msra.mxu0 0.0
    %390 = vmatprep.subr.mxu0 0.0
    %391 = vmatpush1.msra.mxu0 0.0
    %392 = vmatprep.subr.mxu0 0.0
    %393 = vmatpush1.msra.mxu0 0.0
    %394 = vmatprep.subr.mxu0 0.0
    %395 = vmatpush1.msra.mxu0 0.0
    %396 = vmatprep.subr.mxu0 0.0
    %397 = vmatpush1.msra.mxu0 0.0
    %398 = vmatprep.subr.mxu0 0.0
    %399 = vmatpush1.msra.mxu0 0.0
    %400 = vmatprep.subr.mxu0 0.0
    %401 = vmatpush1.msra.mxu0 0.0
    %402 = vmatprep.subr.mxu0 0.0
    %403 = vmatpush1.msra.mxu0 0.0
    %404 = vmatprep.subr.mxu0 0.0
    %405 = vmatpush1.msra.mxu0 0.0
    %406 = vmatprep.subr.mxu0 0.0
    %407 = vmatpush1.msra.mxu0 0.0
    %408 = vmatprep.subr.mxu0 0.0
    %409 = vmatpush1.msra.mxu0 0.0
    %410 = vmatprep.subr.mxu0 0.0
    %411 = vmatpush1.msra.mxu0 0.0
    %412 = vmatprep.subr.mxu0 0.0
    %413 = vmatpush1.msra.mxu0 0.0
    %414 = vmatprep.subr.mxu0 0.0
    %415 = vmatpush1.msra.mxu0 0.0
    %416 = vmatprep.subr.mxu0 0.0
    %417 = vmatpush1.msra.mxu0 0.0
    %418 = vmatprep.subr.mxu0 0.0
    %419 = vmatpush1.msra.mxu0 0.0
    %420 = vmatprep.subr.mxu0 0.0
    %421 = vmatpush1.msra.mxu0 0.0
    %422 = vmatprep.subr.mxu0 0.0
    %423 = vmatpush1.msra.mxu0 0.0
    %424 = vmatprep.mubr.f32.mxu0 0.0
    %425 = vmatmul.mubr.f32.gmra.mrb[0].mxu0 %v355
    %v426 = vpop.f32.mrb[0].mxu0
    %v427 = vadd.f32 %v353, %v426
    %v428 = vpop.f32.mrb[0].mxu0
    %429 = vdwg.mxu0
    %v430 = vmul.f32 %v427, 0.5
    %v431 = vtanh.pop %v430
    %v432 = vmul.f32 %v431, 0.5
    %v433 = vadd.f32 %v432, 0.5
    %434 = vst [vmem:[#allocation3] sm:$0x1] %v433
    // Predicated region
    $region30: #{tpu_custom_call.1} parent=1 // pred_check
      _
    $region31: #{tpu_custom_call.1} parent=1 // pred_check_branch
      %436 = sbr.rel (0) target = $region33
    $region32: #{tpu_custom_call.1} parent=1 // pred_region
      %s438 = ssub.s32 16, 16
      %439 = vsyncadd [#allocation4], %s438
      %s441 = sshll.u32 [#allocation3], 4
      %s442 = int_to_ptr.vmem [resolvable:$true] %s441
      %444 = dma.vmem_to_hbm [thread:$0]  %s442, 16, %s7, [#allocation4]
    $region33: #{tpu_custom_call.1} parent=1 // pred_fallthru
      _
    // Predicated region
    $region34: #{tpu_custom_call.1} parent=1 // pred_check
      _
    $region35: #{tpu_custom_call.1} parent=1 // pred_check_branch
      %446 = sbr.rel (0) target = $region37
    $region36: #{tpu_custom_call.1} parent=1 // pred_region
      %447 = dma.done [#allocation4], 16
    $region37: #{tpu_custom_call.1} parent=1 // pred_fallthru
      _
    %448 = vsyncpa [#allocation4], 1

</llo_original>
